<compile_context>
chip_gen: v5e
topology: v5e:2x2
jax: 0.10.0
libtpu: 0.0.40
codegen_flags: <defaults>
</compile_context>

<pallas_src>
import functools

import jax
import jax.numpy as jnp
from jax.experimental import pallas as pl
from jax.experimental.pallas import tpu as pltpu

_NEG = -1e30   # pad-class bias: exp() underflows to 0, never influences max/denom
_SUB = 8       # f32 sublane packing: pad class axis to a multiple of 8 sublanes


def _round_up(n, m):
    return ((n + m - 1) // m) * m


def _fused_softmax_t(x_ref, w1_ref, b1_ref, w2_ref, b2_ref):
    """linear1 -> relu -> linear2 -> max-shift/exp/denom, transposed orientation.

    x_ref:  (TM, D)      f32 (cast to bf16 in-kernel)
    w1_ref: (H, D)       bf16 (Torch layout, VMEM-resident)
    b1_ref: (H, 1)       f32
    w2_ref: (C_sub, H)   bf16 (class axis padded to 8 sublanes)
    b2_ref: (C_sub, 1)   f32  (pad rows hold -1e30)

    Returns shifted (C_sub, TM), e = exp(shifted) (C_sub, TM), denom (1, TM).
    """
    x = x_ref[...].astype(w1_ref.dtype)                       # bf16 cast hidden under DMA
    # h^T = relu(W1 @ x^T + b1): contract the feature axis of both operands
    # (q @ k^T pattern) so hidden lands on sublanes, batch on lanes.
    h_t = jax.lax.dot_general(
        w1_ref[...], x, (((1,), (1,)), ((), ())),
        preferred_element_type=jnp.float32)                   # (H, TM)
    h_t = jnp.maximum(h_t + b1_ref[...], 0.0)
    logits_t = jnp.dot(w2_ref[...], h_t.astype(w2_ref.dtype),
                       preferred_element_type=jnp.float32)    # (C_sub, TM)
    logits_t = logits_t + b2_ref[...]                         # pad rows -> ~-1e30
    m = jnp.max(logits_t, axis=0, keepdims=True)              # sublane reduce (XLU)
    shifted = logits_t - m
    e = jnp.exp(shifted)                                      # dense: C_sub*TM exps only
    denom = jnp.sum(e, axis=0, keepdims=True)                 # (1, TM)
    return shifted, e, denom


def _probs_kernel(x_ref, w1_ref, b1_ref, w2_ref, b2_ref, probs_ref):
    """Inference: fused softmax probs, written transposed (C_sub, TM), lane-dense."""
    _, e, denom = _fused_softmax_t(x_ref, w1_ref, b1_ref, w2_ref, b2_ref)
    probs_ref[...] = (e * pl.reciprocal(denom, approx=True)).astype(probs_ref.dtype)


def _nll_kernel(batch, x_ref, w1_ref, b1_ref, w2_ref, b2_ref, y_ref, nll_ref):
    """Training: fused per-example NLL (1, TM); padded batch lanes are zeroed."""
    shifted, _, denom = _fused_softmax_t(x_ref, w1_ref, b1_ref, w2_ref, b2_ref)
    c_sub, tm = shifted.shape
    cls = jax.lax.broadcasted_iota(jnp.int32, (c_sub, tm), 0)
    # shifted[y] via one-hot select + sublane reduce (no gather needed)
    tgt = jnp.sum(jnp.where(cls == y_ref[...], shifted, 0.0), axis=0, keepdims=True)
    nll = jnp.log(denom) - tgt                                 # = -log_softmax[y]
    row = pl.program_id(0) * tm + jax.lax.broadcasted_iota(jnp.int32, (1, tm), 1)
    nll_ref[...] = jnp.where(row < batch, nll, 0.0)            # mask padded rows


def prepare_params(params, *, compute_dtype=jnp.bfloat16):
    """One-time layout prep: bf16 weights, class axis padded to 8 sublanes."""
    w1 = jnp.asarray(params["w1"], jnp.float32)   # (H, D_in)
    b1 = jnp.asarray(params["b1"], jnp.float32)   # (H,)
    w2 = jnp.asarray(params["w2"], jnp.float32)   # (C, H)
    b2 = jnp.asarray(params["b2"], jnp.float32)   # (C,)
    hidden = w1.shape[0]
    c = w2.shape[0]
    c_sub = _round_up(max(c, 1), _SUB)

    w2_pad = jnp.zeros((c_sub, hidden), compute_dtype).at[:c, :].set(
        w2.astype(compute_dtype))
    b2_col = jnp.full((c_sub, 1), _NEG, jnp.float32).at[:c, 0].set(b2)

    return {
        "w1": w1.astype(compute_dtype),   # (H, D_in) bf16 — Torch layout, no transpose
        "b1_col": b1[:, None],            # (H, 1) f32
        "w2": w2_pad,                     # (C_sub, H) bf16
        "b2_col": b2_col,                 # (C_sub, 1) f32 (-1e30 on pad classes)
        "num_classes": c,
    }


def torch_model_forward(x, prep, y_true=None, *, tile_m=1024):
    """Mirrors TorchModel.forward: softmax probs, or mean CE loss if y_true given."""
    x = jnp.asarray(x, jnp.float32)
    b, d_in = x.shape
    hidden = prep["w1"].shape[0]
    c_sub = prep["w2"].shape[0]
    c = prep["num_classes"]

    tm = min(tile_m, _round_up(b, 8))            # f32 sublane-aligned batch tile
    b_pad = _round_up(b, tm)
    if b_pad != b:
        x = jnp.pad(x, ((0, b_pad - b), (0, 0)))
    grid = (b_pad // tm,)

    x_spec = pl.BlockSpec((tm, d_in), lambda i: (i, 0))          # pipelined batch tile
    w_specs = [
        pl.BlockSpec((hidden, d_in), lambda i: (0, 0)),          # w1  (resident)
        pl.BlockSpec((hidden, 1), lambda i: (0, 0)),             # b1  (resident)
        pl.BlockSpec((c_sub, hidden), lambda i: (0, 0)),         # w2  (resident)
        pl.BlockSpec((c_sub, 1), lambda i: (0, 0)),              # b2  (resident)
    ]
    cparams = pltpu.CompilerParams(
        dimension_semantics=("parallel",),                       # batch tiles independent
        vmem_limit_bytes=32 * 1024 * 1024,                       # safe on v5e..v7x
    )

    if y_true is None:
        probs_t = pl.pallas_call(
            _probs_kernel,
            out_shape=jax.ShapeDtypeStruct((c_sub, b_pad), jnp.float32),
            grid=grid,
            in_specs=[x_spec] + w_specs,
            out_specs=pl.BlockSpec((c_sub, tm), lambda i: (0, i)),
            compiler_params=cparams,
        )(x, prep["w1"], prep["b1_col"], prep["w2"], prep["b2_col"])
        # Tiny (C_sub, B) -> (B, C) relayout to match the nn.Linear API shape.
        return probs_t[:c, :b].T

    y = jnp.zeros((1, b_pad), jnp.int32).at[0, :b].set(jnp.asarray(y_true, jnp.int32))
    nll = pl.pallas_call(
        functools.partial(_nll_kernel, b),
        out_shape=jax.ShapeDtypeStruct((1, b_pad), jnp.float32),
        grid=grid,
        in_specs=[x_spec] + w_specs + [pl.BlockSpec((1, tm), lambda i: (0, i))],
        out_specs=pl.BlockSpec((1, tm), lambda i: (0, i)),
        compiler_params=cparams,
    )(x, prep["w1"], prep["b1_col"], prep["w2"], prep["b2_col"], y)
    return jnp.sum(nll) / b                                      # mean CE (padded lanes are 0)


def init_params(key, input_size, output_size, hidden=16):
    """PyTorch-Linear-style uniform init (deterministic)."""
    k1, k2, k3, k4 = jax.random.split(key, 4)
    bound1 = 1.0 / jnp.sqrt(input_size)
    bound2 = 1.0 / jnp.sqrt(hidden)
    return {
        "w1": jax.random.uniform(k1, (hidden, input_size), jnp.float32, -bound1, bound1),
        "b1": jax.random.uniform(k2, (hidden,), jnp.float32, -bound1, bound1),
        "w2": jax.random.uniform(k3, (output_size, hidden), jnp.float32, -bound2, bound2),
        "b2": jax.random.uniform(k4, (output_size,), jnp.float32, -bound2, bound2),
    }


def _reference(x, params, *, bf16=True):
    """Pure-JAX reference. bf16=True mirrors the kernel's matmul-input casts."""
    w1, b1 = params["w1"], params["b1"]
    w2, b2 = params["w2"], params["b2"]
    if bf16:
        x = x.astype(jnp.bfloat16).astype(jnp.float32)
        w1 = w1.astype(jnp.bfloat16).astype(jnp.float32)
        w2 = w2.astype(jnp.bfloat16).astype(jnp.float32)
    h = jnp.maximum(x @ w1.T + b1, 0.0)
    if bf16:
        h = h.astype(jnp.bfloat16).astype(jnp.float32)
    logits = h @ w2.T + b2
    return jax.nn.softmax(logits, axis=1), jax.nn.log_softmax(logits, axis=1)


if __name__ == "__main__":
    key = jax.random.PRNGKey(0)
    k_param, k_x, k_y, k_bx, k_by = jax.random.split(key, 5)

    batch, input_size, output_size = 8, 32, 8
    params = init_params(k_param, input_size, output_size)
    prep = prepare_params(params)                      # one-time layout prep

    x = jax.random.normal(k_x, (batch, input_size), jnp.float32)
    y_true = jax.random.randint(k_y, (batch,), 0, output_size)

    # Inference branch: softmax probabilities (fused in-kernel).
    probs = jax.block_until_ready(torch_model_forward(x, prep))
    # Training branch: mean cross-entropy loss (fused per-example NLL in-kernel).
    loss = jax.block_until_ready(torch_model_forward(x, prep, y_true=y_true))

    # --- correctness checks (small batch) ------------------------------------
    probs_b, logp_b = _reference(x, params, bf16=True)     # matches kernel precision
    probs_f, _ = _reference(x, params, bf16=False)         # full-f32 ground truth
    loss_ref = -jnp.mean(jnp.take_along_axis(logp_b, y_true[:, None], axis=1))

    assert probs.shape == (batch, output_size)
    assert jnp.allclose(probs, probs_b, atol=5e-3), "probs mismatch (bf16-matched ref)"
    assert jnp.allclose(probs, probs_f, atol=5e-2), "probs mismatch (f32 ref)"
    assert jnp.allclose(jnp.sum(probs, axis=1), 1.0, atol=5e-3), "rows must sum to ~1"
    assert jnp.isfinite(loss), "loss not finite"
    assert jnp.allclose(loss, loss_ref, atol=1e-3), "CE loss mismatch"

    # --- multi-tile + ragged-batch path: B=5000 -> TM=1024, grid=(5,), pad to 5120.
    big = 5000
    xb = jax.random.normal(k_bx, (big, input_size), jnp.float32)
    yb = jax.random.randint(k_by, (big,), 0, output_size)
    probs_big = jax.block_until_ready(torch_model_forward(xb, prep))
    loss_big = jax.block_until_ready(torch_model_forward(xb, prep, y_true=yb))
    pb_ref, lp_ref = _reference(xb, params, bf16=True)
    lb_ref = -jnp.mean(jnp.take_along_axis(lp_ref, yb[:, None], axis=1))
    assert probs_big.shape == (big, output_size)
    assert jnp.allclose(probs_big, pb_ref, atol=5e-3), "large-batch probs mismatch"
    assert jnp.allclose(jnp.sum(probs_big, axis=1), 1.0, atol=5e-3)
    assert jnp.allclose(loss_big, lb_ref, atol=1e-3), "large-batch CE loss mismatch"

    print("KERNEL_OK")
</pallas_src>

<mosaic_0001>
module attributes {stable_mosaic.version = 11 : i64} {
  func.func @_probs_kernel(%arg0: i32, %arg1: memref<8x32xf32, #tpu.memory_space<vmem>>, %arg2: memref<16x32xbf16, #tpu.memory_space<vmem>>, %arg3: memref<16x1xf32, #tpu.memory_space<vmem>>, %arg4: memref<8x16xbf16, #tpu.memory_space<vmem>>, %arg5: memref<8x1xf32, #tpu.memory_space<vmem>>, %arg6: memref<8x8xf32, #tpu.memory_space<vmem>>) attributes {dimension_semantics = [#tpu.dimension_semantics<parallel>], iteration_bounds = array<i64: 1>, scalar_prefetch = 0 : i64, scratch_operands = 0 : i64, tpu.core_type = #tpu.core_type<tc>, window_params = [{transform_indices = @transform_0, window_bounds = array<i64: 8, 32>}, {pipeline_mode = #tpu.pipeline_mode<synchronous>, transform_indices = @transform_1, window_bounds = array<i64: 16, 32>}, {pipeline_mode = #tpu.pipeline_mode<synchronous>, transform_indices = @transform_2, window_bounds = array<i64: 16, 1>}, {pipeline_mode = #tpu.pipeline_mode<synchronous>, transform_indices = @transform_3, window_bounds = array<i64: 8, 16>}, {pipeline_mode = #tpu.pipeline_mode<synchronous>, transform_indices = @transform_4, window_bounds = array<i64: 8, 1>}, {transform_indices = @transform_5, window_bounds = array<i64: 8, 8>}]} {
    %c0 = arith.constant 0 : index
    %c0_0 = arith.constant 0 : index
    %0 = vector.load %arg1[%c0, %c0_0] : memref<8x32xf32, #tpu.memory_space<vmem>>, vector<8x32xf32>
    %1 = arith.truncf %0 : vector<8x32xf32> to vector<8x32xbf16>
    %c0_1 = arith.constant 0 : index
    %c0_2 = arith.constant 0 : index
    %2 = vector.load %arg2[%c0_1, %c0_2] : memref<16x32xbf16, #tpu.memory_space<vmem>>, vector<16x32xbf16>
    %cst = arith.constant dense<0.000000e+00> : vector<16x8xf32>
    %3 = tpu.matmul %2, %1, %cst {dimension_numbers = #tpu.dot_dimension_numbers<[1], [1], [0], [0], [0, 0, 1, 0], [], []>} : vector<16x32xbf16>, vector<8x32xbf16>, vector<16x8xf32> -> vector<16x8xf32>
    %c0_3 = arith.constant 0 : index
    %c0_4 = arith.constant 0 : index
    %4 = vector.load %arg3[%c0_3, %c0_4] : memref<16x1xf32, #tpu.memory_space<vmem>>, vector<16x1xf32>
    %5 = vector.broadcast %4 : vector<16x1xf32> to vector<16x8xf32>
    %6 = arith.addf %3, %5 : vector<16x8xf32>
    %cst_5 = arith.constant 0.000000e+00 : f32
    %7 = vector.broadcast %cst_5 : f32 to vector<16x8xf32>
    %8 = arith.maximumf %6, %7 : vector<16x8xf32>
    %c0_6 = arith.constant 0 : index
    %c0_7 = arith.constant 0 : index
    %9 = vector.load %arg4[%c0_6, %c0_7] : memref<8x16xbf16, #tpu.memory_space<vmem>>, vector<8x16xbf16>
    %10 = arith.truncf %8 : vector<16x8xf32> to vector<16x8xbf16>
    %cst_8 = arith.constant dense<0.000000e+00> : vector<8x8xf32>
    %11 = tpu.matmul %9, %10, %cst_8 {dimension_numbers = #tpu.dot_dimension_numbers<[1], [0], [0], [1], [0, 0, 1, 1], [], []>} : vector<8x16xbf16>, vector<16x8xbf16>, vector<8x8xf32> -> vector<8x8xf32>
    %c0_9 = arith.constant 0 : index
    %c0_10 = arith.constant 0 : index
    %12 = vector.load %arg5[%c0_9, %c0_10] : memref<8x1xf32, #tpu.memory_space<vmem>>, vector<8x1xf32>
    %13 = vector.broadcast %12 : vector<8x1xf32> to vector<8x8xf32>
    %14 = arith.addf %11, %13 : vector<8x8xf32>
    %cst_11 = arith.constant dense<0xFF800000> : vector<8xf32>
    %15 = vector.multi_reduction <maximumf>, %14, %cst_11 [0] : vector<8x8xf32> to vector<8xf32>
    %16 = vector.shape_cast %15 : vector<8xf32> to vector<1x8xf32>
    %17 = vector.broadcast %16 : vector<1x8xf32> to vector<8x8xf32>
    %18 = arith.subf %14, %17 : vector<8x8xf32>
    %19 = math.exp %18 : vector<8x8xf32>
    %cst_12 = arith.constant dense<0.000000e+00> : vector<8xf32>
    %20 = vector.multi_reduction <add>, %19, %cst_12 [0] : vector<8x8xf32> to vector<8xf32>
    %21 = vector.shape_cast %20 : vector<8xf32> to vector<1x8xf32>
    %22 = tpu.reciprocal %21 {approx = true} : vector<1x8xf32> -> vector<1x8xf32>
    %23 = vector.broadcast %22 : vector<1x8xf32> to vector<8x8xf32>
    %24 = arith.mulf %19, %23 : vector<8x8xf32>
    %c0_13 = arith.constant 0 : index
    %c0_14 = arith.constant 0 : index
    %25 = vector.load %arg6[%c0_13, %c0_14] : memref<8x8xf32, #tpu.memory_space<vmem>>, vector<8x8xf32>
    tpu.vector_store %arg6[%c0_13, %c0_14], %24 {strides = array<i32>} : memref<8x8xf32, #tpu.memory_space<vmem>>, vector<8x8xf32>,
    return
  }
  func.func @transform_0(%arg0: i32) -> (i32, i32) {
    %c0_i32 = arith.constant 0 : i32
    %c0_i32_0 = arith.constant 0 : i32
    return %arg0, %c0_i32 : i32, i32
  }
  func.func @transform_1(%arg0: i32) -> (i32, i32) {
    %c0_i32 = arith.constant 0 : i32
    %c0_i32_0 = arith.constant 0 : i32
    %c0_i32_1 = arith.constant 0 : i32
    return %c0_i32, %c0_i32_0 : i32, i32
  }
  func.func @transform_2(%arg0: i32) -> (i32, i32) {
    %c0_i32 = arith.constant 0 : i32
    %c0_i32_0 = arith.constant 0 : i32
    %c0_i32_1 = arith.constant 0 : i32
    return %c0_i32, %c0_i32_0 : i32, i32
  }
  func.func @transform_3(%arg0: i32) -> (i32, i32) {
    %c0_i32 = arith.constant 0 : i32
    %c0_i32_0 = arith.constant 0 : i32
    %c0_i32_1 = arith.constant 0 : i32
    return %c0_i32, %c0_i32_0 : i32, i32
  }
  func.func @transform_4(%arg0: i32) -> (i32, i32) {
    %c0_i32 = arith.constant 0 : i32
    %c0_i32_0 = arith.constant 0 : i32
    %c0_i32_1 = arith.constant 0 : i32
    return %c0_i32, %c0_i32_0 : i32, i32
  }
  func.func @transform_5(%arg0: i32) -> (i32, i32) {
    %c0_i32 = arith.constant 0 : i32
    %c0_i32_0 = arith.constant 0 : i32
    return %c0_i32, %arg0 : i32, i32
  }
}

</mosaic_0001>

<llo_original>
// kernel: tpu_custom_call.1
$region0: #{tpu_custom_call.1}
  #allocation0 [shape = 'u32[]', space=smem, size = 0x4, offset = 0x4, fixed_abs, tag = 'smem constant byte address 0x4 - core index']
  #allocation1 [shape = 'u32[72,128]{1,0:T(1,128)}', space=vmem, size = 0x9000, scoped, tag = 'internal scratch']
  %s0 = inlined_call_operand.vmem [shape: f32[8,32], index: 0, kind: input, shape index: {}]
  %s1 = inlined_call_operand.vmem [shape: bf16[16,32], index: 1, kind: input, shape index: {}]
  %s2 = inlined_call_operand.vmem [shape: f32[16,1], index: 2, kind: input, shape index: {}]
  %s3 = inlined_call_operand.vmem [shape: bf16[8,16], index: 3, kind: input, shape index: {}]
  %s4 = inlined_call_operand.vmem [shape: f32[8,1], index: 4, kind: input, shape index: {}]
  %s5 = inlined_call_operand.hbm [shape: f32[8,8], index: 5, kind: output, shape index: {}]
  %s6 = sld [smem:[#allocation0]]
  $region30: #{tpu_custom_call.1} parent=0
    _
  %s8 = ssub.s32 1, %s6
  %s9 = scalar_select 0, %s8, %s6
  $region1: #{tpu_custom_call.1} parent=0
    #allocation2 [shape = 'u8[4096]{0}', space=vmem, size = 0x1000, scoped, tag = 'output window, operand 0, single buffered']
    #allocation3 [shape = 's32[1]{0}', space=sflag, size = 0x4, scoped, tag = 'scoped memory for tpu_custom_call.1']
    %10 = vsyncpa [#allocation3], 0
    // Predicated region
    $region2: #{tpu_custom_call.1} parent=1 // pred_check
      _
    $region3: #{tpu_custom_call.1} parent=1 // pred_check_branch
      %12 = sbr.rel (0) target = $region5
    $region4: #{tpu_custom_call.1} parent=1 // pred_region
      _
    $region5: #{tpu_custom_call.1} parent=1 // pred_fallthru
      _
    // Predicated region
    $region6: #{tpu_custom_call.1} parent=1 // pred_check
      _
    $region7: #{tpu_custom_call.1} parent=1 // pred_check_branch
      %14 = sbr.rel (0) target = $region9
    $region8: #{tpu_custom_call.1} parent=1 // pred_region
      _
    $region9: #{tpu_custom_call.1} parent=1 // pred_fallthru
      _
    // Predicated region
    $region10: #{tpu_custom_call.1} parent=1 // pred_check
      _
    $region11: #{tpu_custom_call.1} parent=1 // pred_check_branch
      %16 = sbr.rel (0) target = $region13
    $region12: #{tpu_custom_call.1} parent=1 // pred_region
      _
    $region13: #{tpu_custom_call.1} parent=1 // pred_fallthru
      _
    // Predicated region
    $region14: #{tpu_custom_call.1} parent=1 // pred_check
      _
    $region15: #{tpu_custom_call.1} parent=1 // pred_check_branch
      %18 = sbr.rel (0) target = $region17
    $region16: #{tpu_custom_call.1} parent=1 // pred_region
      _
    $region17: #{tpu_custom_call.1} parent=1 // pred_fallthru
      _
    // Predicated region
    $region18: #{tpu_custom_call.1} parent=1 // pred_check
      _
    $region19: #{tpu_custom_call.1} parent=1 // pred_check_branch
      %20 = sbr.rel (0) target = $region21
    $region20: #{tpu_custom_call.1} parent=1 // pred_region
      _
    $region21: #{tpu_custom_call.1} parent=1 // pred_fallthru
      _
    %v22 = vld [vmem:[%s0] sm:$0xff]
    %v23 = vpack.c.bf16 %v22, %v22
    %v24 = vld [vmem:[%s1] sm:$0xf]
    %v25 = vld [vmem:[%s1 + $0x4] sm:$0xf]
    %v26 = vld [vmem:[%s2] sm:$0xff]
    %v27 = vld [vmem:[%s2 + $0x8] sm:$0xff]
    %29 = vset.pattern.permute.xlu0 0
    %30 = vperm.xlu0 %29, %v26
    %v31 = vpop.permute.xlu0 %30
    %34 = vset.pattern.permute.xlu0 0
    %35 = vperm.xlu0 %34, %v27
    %v36 = vpop.permute.xlu0 %35
    %v40 = vunpack.c.l.b16 %v24
    %v41 = vunpack.c.l.b16 %v25
    %v42 = vpack.c.b16 %v41, %v40
    %vm43 = vcmask 261120
    %v45 = vsel %vm43, %v42, 0
    %v48 = vsel %vm43, %v23, 0
    %50 = vmatpush.bf16.xpose.msra.mxu0 0
    %51 = vmatpush.bf16.xpose.msra.mxu0 0
    %52 = vmatpush.bf16.xpose.msra.mxu0 0
    %53 = vmatpush.bf16.xpose.msra.mxu0 0
    %54 = vmatpush.bf16.xpose.msra.mxu0 0
    %55 = vmatpush.bf16.xpose.msra.mxu0 0
    %56 = vmatpush.bf16.xpose.msra.mxu0 0
    %57 = vmatpush.bf16.xpose.msra.mxu0 %v48
    %58 = vmatmul.bf16.gmra.mxu0 %v45
    %v59 = vpop.f32.mrf.mxu0
    %v60 = vadd.f32 %v31, %v59
    %v61 = vpop.f32.mrf.mxu0
    %v62 = vadd.f32 %v36, %v61
    %63 = vdwg.mxu0
    %v64 = vmax.f32 %v60, 0.0
    %v65 = vmax.f32 %v62, 0.0
    %v66 = vld [vmem:[%s3] sm:$0xf]
    %v67 = vpack.c.bf16 %v65, %v64
    %v68 = vld [vmem:[%s4] sm:$0xff]
    %70 = vset.pattern.permute.xlu0 0
    %71 = vperm.xlu0 %70, %v68
    %v72 = vpop.permute.xlu0 %71
    %vm74 = vcmask 130048
    %v76 = vsel %vm74, %v66, 0
    %78 = vmatpush.bf16.msra.mxu0 0
    %79 = vmatpush.bf16.msra.mxu0 0
    %80 = vmatpush.bf16.msra.mxu0 0
    %81 = vmatpush.bf16.msra.mxu0 0
    %82 = vmatpush.bf16.msra.mxu0 0
    %83 = vmatpush.bf16.msra.mxu0 0
    %84 = vmatpush.bf16.msra.mxu0 0
    %85 = vmatpush.bf16.msra.mxu0 %v67
    %86 = vmatmul.bf16.gmra.mxu0 %v76
    %v87 = vpop.f32.mrf.mxu0
    %v88 = vadd.f32 %v72, %v87
    %v89 = vpop.f32.mrf.mxu0
    %90 = vdwg.mxu0
    %vm91 = vcmask 64512
    %v92 = vsel %vm91, %v88, -inf
    %v93 = vrot.slane %v92, 4
    %v94 = vmax.f32 %v92, %v93
    %v95 = vrot.slane %v94, 2
    %v96 = vmax.f32 %v94, %v95
    %v97 = vrot.slane %v96, 1
    %v98 = vmax.f32 %v96, %v97
    %v99 = vsub.f32 %v88, %v98
    %v100 = vmul.f32 %v99, 1.442695
    %v101 = vpow.pop %v100
    %v102 = vsel %vm91, %v101, 0.0
    %v103 = vrot.slane %v102, 4
    %v104 = vadd.f32 %v102, %v103
    %v105 = vrot.slane %v104, 2
    %v106 = vadd.f32 %v104, %v105
    %v107 = vrot.slane %v106, 1
    %v108 = vadd.f32 %v106, %v107
    %v109 = vrcp.pop %v108
    %v110 = vmul.f32 %v101, %v109
    %111 = vst.msk [vmem:[#allocation2] sm:$0xff] %vm91, %v110
    // Predicated region
    $region22: #{tpu_custom_call.1} parent=1 // pred_check
      _
    $region23: #{tpu_custom_call.1} parent=1 // pred_check_branch
      %113 = sbr.rel (0) target = $region25
    $region24: #{tpu_custom_call.1} parent=1 // pred_region
      %115 = vsyncadd [#allocation3], 0
      %s117 = sshll.u32 [#allocation2], 4
      %s118 = int_to_ptr.vmem [resolvable:$true] %s117
      %s119 = sshll.u32 %s5, 4
      %s120 = int_to_ptr.hbm [resolvable:$true] %s119
      %122 = dma.vmem_to_hbm [thread:$0]  %s118, 128, %s120, [#allocation3]
    $region25: #{tpu_custom_call.1} parent=1 // pred_fallthru
      _
    // Predicated region
    $region26: #{tpu_custom_call.1} parent=1 // pred_check
      _
    $region27: #{tpu_custom_call.1} parent=1 // pred_check_branch
      %124 = sbr.rel (0) target = $region29
    $region28: #{tpu_custom_call.1} parent=1 // pred_region
      %126 = dma.done [#allocation3], 128
    $region29: #{tpu_custom_call.1} parent=1 // pred_fallthru
      _
    %127 = vsyncpa [#allocation3], 1

</llo_original>
